<compile_context>
chip_gen: v5e
topology: v5e:2x2
jax: 0.10.0
libtpu: 0.0.40
codegen_flags: <defaults>
</compile_context>

<pallas_src>
import math
import jax
import jax.numpy as jnp
from jax.experimental import pallas as pl
from jax.experimental.pallas import tpu as pltpu


# ----------------------------------------------------------------------------
# Generic tiled matmul + bias kernel:  out = A @ B + bias   (f32 accumulation)
# ----------------------------------------------------------------------------
def _make_matmul_bias_kernel(tk, b_resident, acc_in_out):
    def kernel(a_ref, b_ref, bias_ref, o_ref, *scratch):
        k = pl.program_id(2)
        nk = pl.num_programs(2)

        if b_resident:
            # B holds the whole (K, tn) strip in VMEM; slice the current k tile.
            start = pl.multiple_of(k * tk, tk)
            b_tile = b_ref[pl.ds(start, tk), :]
        else:
            b_tile = b_ref[...]

        partial = jnp.dot(a_ref[...], b_tile, preferred_element_type=jnp.float32)

        if acc_in_out:
            # f32 output: its block index ignores k, so it is resident across
            # the k loop -> accumulate directly, no scratch needed.
            @pl.when(k == 0)
            def _():
                o_ref[...] = jnp.zeros_like(o_ref)

            o_ref[...] += partial

            @pl.when(k == nk - 1)
            def _():
                o_ref[...] += bias_ref[...]
        else:
            acc_ref = scratch[0]

            @pl.when(k == 0)
            def _():
                acc_ref[...] = jnp.zeros_like(acc_ref)

            acc_ref[...] += partial

            @pl.when(k == nk - 1)
            def _():
                o_ref[...] = (acc_ref[...] + bias_ref[...]).astype(o_ref.dtype)

    return kernel


def tiled_matmul_bias(a, b, bias, *, tm, tn, tk, out_dtype=jnp.float32,
                      a_buffers=2, b_resident_budget=12 * 1024 * 1024):
    """A:(M,K) @ B:(K,N) + bias:(1,N) with a (M/tm, N/tn, K/tk) grid."""
    M, K = a.shape
    K2, N = b.shape
    assert K == K2 and bias.shape == (1, N)
    assert M % tm == 0 and N % tn == 0 and K % tk == 0
    grid = (M // tm, N // tn, K // tk)
    out_dtype = jnp.dtype(out_dtype)

    # Accumulate straight into the f32 output block (resident across k);
    # bf16 outputs go through an f32 VMEM scratch and a cast epilogue.
    acc_in_out = out_dtype == jnp.dtype(jnp.float32)

    # Keep the whole (K, tn) strip of B resident in VMEM when it fits the
    # budget: the heavy adj passes then read x1 / x23 from HBM exactly once.
    b_resident = 2 * K * tn * b.dtype.itemsize <= b_resident_budget

    # Extra input buffering on A only pays off with enough k steps.
    eff_a_buffers = a_buffers if grid[2] >= a_buffers else 2

    if b_resident:
        b_spec = pl.BlockSpec((K, tn), lambda i, j, k: (0, j))
    else:
        b_spec = pl.BlockSpec((tk, tn), lambda i, j, k: (k, j))

    if eff_a_buffers > 2:
        a_spec = pl.BlockSpec((tm, tk), lambda i, j, k: (i, k),
                              pipeline_mode=pl.Buffered(eff_a_buffers))
    else:
        a_spec = pl.BlockSpec((tm, tk), lambda i, j, k: (i, k))

    scratch_shapes = [] if acc_in_out else [pltpu.VMEM((tm, tn), jnp.float32)]

    # Explicit scoped-VMEM limit derived from the actual working set
    # (v5e default scoped VMEM is only 16 MiB; v7x physical is 64 MiB).
    vmem_bytes = (
        eff_a_buffers * tm * tk * a.dtype.itemsize
        + 2 * (K * tn if b_resident else tk * tn) * b.dtype.itemsize
        + 2 * tn * bias.dtype.itemsize
        + 2 * tm * tn * out_dtype.itemsize
        + (0 if acc_in_out else tm * tn * 4))
    vmem_limit = int(min(max(vmem_bytes + (4 << 20), 32 << 20), 56 << 20))

    a_hbm = M * K * a.dtype.itemsize
    b_hbm = K * N * b.dtype.itemsize * (1 if b_resident else grid[0])
    o_hbm = M * N * out_dtype.itemsize

    kernel = _make_matmul_bias_kernel(tk, b_resident, acc_in_out)

    return pl.pallas_call(
        kernel,
        out_shape=jax.ShapeDtypeStruct((M, N), out_dtype),
        grid_spec=pltpu.PrefetchScalarGridSpec(
            num_scalar_prefetch=0,
            grid=grid,
            in_specs=[a_spec, b_spec,
                      pl.BlockSpec((1, tn), lambda i, j, k: (0, j))],
            out_specs=pl.BlockSpec((tm, tn), lambda i, j, k: (i, j)),
            scratch_shapes=scratch_shapes),
        compiler_params=pltpu.CompilerParams(
            dimension_semantics=("parallel", "parallel", "arbitrary"),
            vmem_limit_bytes=vmem_limit),
        cost_estimate=pl.CostEstimate(
            flops=2 * M * N * K,
            transcendentals=0,
            bytes_accessed=a_hbm + b_hbm + o_hbm),
    )(a, b, bias)


# ----------------------------------------------------------------------------
# Padding / tiling helpers
# ----------------------------------------------------------------------------
def _round_up(x, m):
    return -(-x // m) * m


def _pad_tile(dim, pref_tile, unit=128, min_grid=1):
    """Pad `dim` to a 128-multiple and pick a 128-multiple tile (<= pref_tile)
    that evenly divides the padded size. If min_grid > 1, shrink the tile so
    the axis has at least `min_grid` tiles (v7x: keep both TensorCores busy)."""
    base = _round_up(dim, unit)
    tile = min(pref_tile, base)
    padded = _round_up(base, tile)
    while min_grid > 1 and padded // tile < min_grid and tile > unit:
        tile = max(unit, (tile // 2 // unit) * unit)
        padded = _round_up(base, tile)
    return padded, tile


def _pad2(x, rows, cols):
    r, c = x.shape
    if (r, c) == (rows, cols):
        return x
    return jnp.pad(x, ((0, rows - r), (0, cols - c)))


# ----------------------------------------------------------------------------
# GCNVAE forward (eval mode): returns (res1, res1, res2)
# ----------------------------------------------------------------------------
def gcnvae_forward(feat, adj, params):
    N, in_dim = feat.shape
    hid = params["w1"].shape[1]
    emb = params["w2"].shape[1]
    e2 = 2 * emb

    # Node axis: 1024-wide tiles amortize grid-step overhead; force >= 2 row
    # tiles when possible so v7x's two TensorCores both get work on the heavy
    # adj passes. Width axes cover the full (padded) output width so j == 1 and
    # the N x N adjacency is read from HBM exactly once per heavy pass.
    Np, T_node = _pad_tile(N, 1024, min_grid=2)
    INp, T_in = _pad_tile(in_dim, 1024)
    HIDp, T_hid = _pad_tile(hid, 1024)
    E2p, T_e2 = _pad_tile(e2, 1024)

    bf16 = jnp.bfloat16
    f32 = jnp.float32

    # bf16 operands everywhere (full-rate MXU path, half the HBM traffic).
    # Cast BEFORE padding so no padded f32 N x N copy is ever materialized.
    feat_p = _pad2(feat.astype(bf16), Np, INp)
    adj_p = _pad2(adj.astype(bf16), Np, Np)

    w1_p = _pad2(params["w1"].astype(bf16), INp, HIDp)
    b1_p = _pad2(params["b1"].reshape(1, -1).astype(f32), 1, HIDp)

    # Fuse gc2/gc3: one matmul pair, adjacency streamed twice total (not 3x),
    # lane-dense 2*emb-wide output.
    w23 = jnp.concatenate([params["w2"], params["w3"]], axis=1).astype(bf16)
    b23 = jnp.concatenate([params["b2"], params["b3"]], axis=0).reshape(1, -1).astype(f32)
    w23_p = _pad2(w23, HIDp, E2p)
    b23_p = _pad2(b23, 1, E2p)

    zeros_hid = jnp.zeros((1, HIDp), f32)
    zeros_e2 = jnp.zeros((1, E2p), f32)

    # Stage 1 (small): X1 = feat @ W1   (gc1 bias deferred past the adj spmm,
    # matching GraphConvolution: output = spmm(adj, feat @ W) + b)
    x1 = tiled_matmul_bias(feat_p, w1_p, zeros_hid,
                           tm=T_node, tn=T_hid, tk=T_in, out_dtype=bf16)
    # Stage 2 (heavy adj pass 1/2): support = adj @ X1 + b1
    support = tiled_matmul_bias(adj_p, x1, b1_p,
                                tm=T_node, tn=T_hid, tk=T_node,
                                out_dtype=bf16, a_buffers=3)
    # Stage 3 (small): X23 = support @ [W2 | W3]
    x23 = tiled_matmul_bias(support, w23_p, zeros_e2,
                            tm=T_node, tn=T_e2, tk=T_hid, out_dtype=bf16)
    # Stage 4 (heavy adj pass 2/2): [res1 | res2] = adj @ X23 + [b2 | b3]
    res12 = tiled_matmul_bias(adj_p, x23, b23_p,
                              tm=T_node, tn=T_e2, tk=T_node,
                              out_dtype=f32, a_buffers=3)

    res12 = res12[:N]
    res1 = res12[:, :emb]
    res2 = res12[:, emb:e2]
    return res1, res1, res2  # eval-mode semantics of GCNVAE.forward


# ----------------------------------------------------------------------------
# Parameter init matching GraphConvolution: U(-1/sqrt(out), 1/sqrt(out))
# ----------------------------------------------------------------------------
def init_params(key, input_dim, hid_dim, emb_dim):
    ks = jax.random.split(key, 6)

    def gc_init(kw, kb, in_d, out_d):
        std = 1.0 / math.sqrt(out_d)
        w = jax.random.uniform(kw, (in_d, out_d), jnp.float32, -std, std)
        b = jax.random.uniform(kb, (out_d,), jnp.float32, -std, std)
        return w, b

    w1, b1 = gc_init(ks[0], ks[1], input_dim, hid_dim)
    w2, b2 = gc_init(ks[2], ks[3], hid_dim, emb_dim)
    w3, b3 = gc_init(ks[4], ks[5], hid_dim, emb_dim)
    return {"w1": w1, "b1": b1, "w2": w2, "b2": b2, "w3": w3, "b3": b3}


if __name__ == "__main__":
    # Small, module-consistent shapes: N=16 nodes, input_dim=16, hid=32, emb=8
    N, INPUT_DIM, HID_DIM, EMB_DIM = 16, 16, 32, 8

    key = jax.random.PRNGKey(0)
    k_feat, k_adj, k_params = jax.random.split(key, 3)

    feat = jax.random.normal(k_feat, (N, INPUT_DIM), jnp.float32)

    # Symmetric normalized adjacency with self-loops (dense stand-in for spmm)
    a = (jax.random.uniform(k_adj, (N, N)) > 0.7).astype(jnp.float32)
    a = jnp.maximum(a, a.T) + jnp.eye(N, dtype=jnp.float32)
    deg_inv_sqrt = 1.0 / jnp.sqrt(a.sum(axis=1))
    adj = a * deg_inv_sqrt[:, None] * deg_inv_sqrt[None, :]

    params = init_params(k_params, INPUT_DIM, HID_DIM, EMB_DIM)

    fwd = jax.jit(gcnvae_forward)
    out, res1, res2 = fwd(feat, adj, params)
    jax.block_until_ready((out, res1, res2))

    # Pure-JAX f32 reference (kernel runs in bf16 -> bf16-level tolerance)
    support_ref = adj @ (feat @ params["w1"]) + params["b1"]
    res1_ref = adj @ (support_ref @ params["w2"]) + params["b2"]
    res2_ref = adj @ (support_ref @ params["w3"]) + params["b3"]

    assert out.shape == (N, EMB_DIM) and res1.shape == (N, EMB_DIM) and res2.shape == (N, EMB_DIM)
    assert jnp.allclose(out, res1), "eval mode must return res1 twice"
    assert jnp.allclose(res1, res1_ref, atol=5e-2, rtol=5e-2), "res1 mismatch"
    assert jnp.allclose(res2, res2_ref, atol=5e-2, rtol=5e-2), "res2 mismatch"

    print("KERNEL_OK")
</pallas_src>

<mosaic_0001>
module attributes {stable_mosaic.version = 11 : i64} {
  func.func @kernel(%arg0: i32, %arg1: i32, %arg2: i32, %arg3: memref<128x128xbf16, #tpu.memory_space<vmem>>, %arg4: memref<128x128xbf16, #tpu.memory_space<vmem>>, %arg5: memref<1x128xf32, #tpu.memory_space<vmem>>, %arg6: memref<128x128xbf16, #tpu.memory_space<vmem>>, %arg7: memref<128x128xf32, #tpu.memory_space<vmem>>) attributes {dimension_semantics = [#tpu.dimension_semantics<parallel>, #tpu.dimension_semantics<parallel>, #tpu.dimension_semantics<arbitrary>], iteration_bounds = array<i64: 1, 1, 1>, scalar_prefetch = 0 : i64, scratch_operands = 1 : i64, tpu.core_type = #tpu.core_type<tc>, window_params = [{transform_indices = @transform_0, window_bounds = array<i64: 128, 128>}, {transform_indices = @transform_1, window_bounds = array<i64: 128, 128>}, {transform_indices = @transform_2, window_bounds = array<i64: 1, 128>}, {transform_indices = @transform_3, window_bounds = array<i64: 128, 128>}]} {
    %c128_i32 = arith.constant 128 : i32
    %0 = arith.muli %arg2, %c128_i32 : i32
    %1 = tpu.assume_multiple %0, 128 : i32
    %2 = arith.index_cast %1 : i32 to index
    %c0 = arith.constant 0 : index
    %3 = vector.load %arg4[%2, %c0] : memref<128x128xbf16, #tpu.memory_space<vmem>>, vector<128x128xbf16>
    %c0_0 = arith.constant 0 : index
    %c0_1 = arith.constant 0 : index
    %4 = vector.load %arg3[%c0_0, %c0_1] : memref<128x128xbf16, #tpu.memory_space<vmem>>, vector<128x128xbf16>
    %cst = arith.constant dense<0.000000e+00> : vector<128x128xf32>
    %5 = tpu.matmul %4, %3, %cst {dimension_numbers = #tpu.dot_dimension_numbers<[1], [0], [0], [1], [0, 0, 1, 1], [], []>} : vector<128x128xbf16>, vector<128x128xbf16>, vector<128x128xf32> -> vector<128x128xf32>
    %c0_i32 = arith.constant 0 : i32
    %6 = arith.cmpi eq, %arg2, %c0_i32 : i32
    %7 = arith.extui %6 : i1 to i32
    %c0_i32_2 = arith.constant 0 : i32
    %8 = arith.cmpi ne, %7, %c0_i32_2 : i32
    scf.if %8 {
      %cst_9 = arith.constant 0.000000e+00 : f32
      %15 = vector.broadcast %cst_9 : f32 to vector<128x128xf32>
      %c0_10 = arith.constant 0 : index
      %c0_11 = arith.constant 0 : index
      %16 = vector.load %arg7[%c0_10, %c0_11] : memref<128x128xf32, #tpu.memory_space<vmem>>, vector<128x128xf32>
      tpu.vector_store %arg7[%c0_10, %c0_11], %15 {strides = array<i32>} : memref<128x128xf32, #tpu.memory_space<vmem>>, vector<128x128xf32>,
    } else {
    }
    %c0_3 = arith.constant 0 : index
    %c0_4 = arith.constant 0 : index
    %9 = vector.load %arg7[%c0_3, %c0_4] : memref<128x128xf32, #tpu.memory_space<vmem>>, vector<128x128xf32>
    %10 = arith.addf %9, %5 : vector<128x128xf32>
    %c0_5 = arith.constant 0 : index
    %c0_6 = arith.constant 0 : index
    %11 = vector.load %arg7[%c0_5, %c0_6] : memref<128x128xf32, #tpu.memory_space<vmem>>, vector<128x128xf32>
    tpu.vector_store %arg7[%c0_5, %c0_6], %10 {strides = array<i32>} : memref<128x128xf32, #tpu.memory_space<vmem>>, vector<128x128xf32>,
    %c0_i32_7 = arith.constant 0 : i32
    %12 = arith.cmpi eq, %arg2, %c0_i32_7 : i32
    %13 = arith.extui %12 : i1 to i32
    %c0_i32_8 = arith.constant 0 : i32
    %14 = arith.cmpi ne, %13, %c0_i32_8 : i32
    scf.if %14 {
      %c0_9 = arith.constant 0 : index
      %c0_10 = arith.constant 0 : index
      %15 = vector.load %arg7[%c0_9, %c0_10] : memref<128x128xf32, #tpu.memory_space<vmem>>, vector<128x128xf32>
      %c0_11 = arith.constant 0 : index
      %c0_12 = arith.constant 0 : index
      %16 = vector.load %arg5[%c0_11, %c0_12] : memref<1x128xf32, #tpu.memory_space<vmem>>, vector<1x128xf32>
      %17 = vector.broadcast %16 : vector<1x128xf32> to vector<128x128xf32>
      %18 = arith.addf %15, %17 : vector<128x128xf32>
      %19 = arith.truncf %18 : vector<128x128xf32> to vector<128x128xbf16>
      %c0_13 = arith.constant 0 : index
      %c0_14 = arith.constant 0 : index
      %20 = vector.load %arg6[%c0_13, %c0_14] : memref<128x128xbf16, #tpu.memory_space<vmem>>, vector<128x128xbf16>
      tpu.vector_store %arg6[%c0_13, %c0_14], %19 {strides = array<i32>} : memref<128x128xbf16, #tpu.memory_space<vmem>>, vector<128x128xbf16>,
    } else {
    }
    return
  }
  func.func @transform_0(%arg0: i32, %arg1: i32, %arg2: i32) -> (i32, i32) {
    %c0_i32 = arith.constant 0 : i32
    return %arg0, %arg2 : i32, i32
  }
  func.func @transform_1(%arg0: i32, %arg1: i32, %arg2: i32) -> (i32, i32) {
    %c0_i32 = arith.constant 0 : i32
    %c0_i32_0 = arith.constant 0 : i32
    return %c0_i32, %arg1 : i32, i32
  }
  func.func @transform_2(%arg0: i32, %arg1: i32, %arg2: i32) -> (i32, i32) {
    %c0_i32 = arith.constant 0 : i32
    %c0_i32_0 = arith.constant 0 : i32
    return %c0_i32, %arg1 : i32, i32
  }
  func.func @transform_3(%arg0: i32, %arg1: i32, %arg2: i32) -> (i32, i32) {
    %c0_i32 = arith.constant 0 : i32
    return %arg0, %arg1 : i32, i32
  }
}

module attributes {stable_mosaic.version = 11 : i64} {
  func.func @kernel(%arg0: i32, %arg1: i32, %arg2: i32, %arg3: memref<128x128xbf16, #tpu.memory_space<vmem>>, %arg4: memref<128x128xbf16, #tpu.memory_space<vmem>>, %arg5: memref<1x128xf32, #tpu.memory_space<vmem>>, %arg6: memref<128x128xf32, #tpu.memory_space<vmem>>) attributes {dimension_semantics = [#tpu.dimension_semantics<parallel>, #tpu.dimension_semantics<parallel>, #tpu.dimension_semantics<arbitrary>], iteration_bounds = array<i64: 1, 1, 1>, scalar_prefetch = 0 : i64, scratch_operands = 0 : i64, tpu.core_type = #tpu.core_type<tc>, window_params = [{transform_indices = @transform_0, window_bounds = array<i64: 128, 128>}, {transform_indices = @transform_1, window_bounds = array<i64: 128, 128>}, {transform_indices = @transform_2, window_bounds = array<i64: 1, 128>}, {transform_indices = @transform_3, window_bounds = array<i64: 128, 128>}]} {
    %c128_i32 = arith.constant 128 : i32
    %0 = arith.muli %arg2, %c128_i32 : i32
    %1 = tpu.assume_multiple %0, 128 : i32
    %2 = arith.index_cast %1 : i32 to index
    %c0 = arith.constant 0 : index
    %3 = vector.load %arg4[%2, %c0] : memref<128x128xbf16, #tpu.memory_space<vmem>>, vector<128x128xbf16>
    %c0_0 = arith.constant 0 : index
    %c0_1 = arith.constant 0 : index
    %4 = vector.load %arg3[%c0_0, %c0_1] : memref<128x128xbf16, #tpu.memory_space<vmem>>, vector<128x128xbf16>
    %cst = arith.constant dense<0.000000e+00> : vector<128x128xf32>
    %5 = tpu.matmul %4, %3, %cst {dimension_numbers = #tpu.dot_dimension_numbers<[1], [0], [0], [1], [0, 0, 1, 1], [], []>} : vector<128x128xbf16>, vector<128x128xbf16>, vector<128x128xf32> -> vector<128x128xf32>
    %c0_i32 = arith.constant 0 : i32
    %6 = arith.cmpi eq, %arg2, %c0_i32 : i32
    %7 = arith.extui %6 : i1 to i32
    %c0_i32_2 = arith.constant 0 : i32
    %8 = arith.cmpi ne, %7, %c0_i32_2 : i32
    scf.if %8 {
      %cst_9 = arith.constant 0.000000e+00 : f32
      %15 = vector.broadcast %cst_9 : f32 to vector<128x128xf32>
      %c0_10 = arith.constant 0 : index
      %c0_11 = arith.constant 0 : index
      %16 = vector.load %arg6[%c0_10, %c0_11] : memref<128x128xf32, #tpu.memory_space<vmem>>, vector<128x128xf32>
      tpu.vector_store %arg6[%c0_10, %c0_11], %15 {strides = array<i32>} : memref<128x128xf32, #tpu.memory_space<vmem>>, vector<128x128xf32>,
    } else {
    }
    %c0_3 = arith.constant 0 : index
    %c0_4 = arith.constant 0 : index
    %9 = vector.load %arg6[%c0_3, %c0_4] : memref<128x128xf32, #tpu.memory_space<vmem>>, vector<128x128xf32>
    %10 = arith.addf %9, %5 : vector<128x128xf32>
    %c0_5 = arith.constant 0 : index
    %c0_6 = arith.constant 0 : index
    %11 = vector.load %arg6[%c0_5, %c0_6] : memref<128x128xf32, #tpu.memory_space<vmem>>, vector<128x128xf32>
    tpu.vector_store %arg6[%c0_5, %c0_6], %10 {strides = array<i32>} : memref<128x128xf32, #tpu.memory_space<vmem>>, vector<128x128xf32>,
    %c0_i32_7 = arith.constant 0 : i32
    %12 = arith.cmpi eq, %arg2, %c0_i32_7 : i32
    %13 = arith.extui %12 : i1 to i32
    %c0_i32_8 = arith.constant 0 : i32
    %14 = arith.cmpi ne, %13, %c0_i32_8 : i32
    scf.if %14 {
      %c0_9 = arith.constant 0 : index
      %c0_10 = arith.constant 0 : index
      %15 = vector.load %arg6[%c0_9, %c0_10] : memref<128x128xf32, #tpu.memory_space<vmem>>, vector<128x128xf32>
      %c0_11 = arith.constant 0 : index
      %c0_12 = arith.constant 0 : index
      %16 = vector.load %arg5[%c0_11, %c0_12] : memref<1x128xf32, #tpu.memory_space<vmem>>, vector<1x128xf32>
      %17 = vector.broadcast %16 : vector<1x128xf32> to vector<128x128xf32>
      %18 = arith.addf %15, %17 : vector<128x128xf32>
      %c0_13 = arith.constant 0 : index
      %c0_14 = arith.constant 0 : index
      %19 = vector.load %arg6[%c0_13, %c0_14] : memref<128x128xf32, #tpu.memory_space<vmem>>, vector<128x128xf32>
      tpu.vector_store %arg6[%c0_13, %c0_14], %18 {strides = array<i32>} : memref<128x128xf32, #tpu.memory_space<vmem>>, vector<128x128xf32>,
    } else {
    }
    return
  }
  func.func @transform_0(%arg0: i32, %arg1: i32, %arg2: i32) -> (i32, i32) {
    %c0_i32 = arith.constant 0 : i32
    return %arg0, %arg2 : i32, i32
  }
  func.func @transform_1(%arg0: i32, %arg1: i32, %arg2: i32) -> (i32, i32) {
    %c0_i32 = arith.constant 0 : i32
    %c0_i32_0 = arith.constant 0 : i32
    return %c0_i32, %arg1 : i32, i32
  }
  func.func @transform_2(%arg0: i32, %arg1: i32, %arg2: i32) -> (i32, i32) {
    %c0_i32 = arith.constant 0 : i32
    %c0_i32_0 = arith.constant 0 : i32
    return %c0_i32, %arg1 : i32, i32
  }
  func.func @transform_3(%arg0: i32, %arg1: i32, %arg2: i32) -> (i32, i32) {
    %c0_i32 = arith.constant 0 : i32
    return %arg0, %arg1 : i32, i32
  }
}

</mosaic_0001>

<llo_original>
// kernel: gcnvae_forward.7
$region0: #{gcnvae_forward.7}
  #allocation0 [shape = 'u32[]', space=smem, size = 0x4, offset = 0x4, fixed_abs, tag = 'smem constant byte address 0x4 - core index']
  #allocation1 [shape = 'u32[72,128]{1,0:T(1,128)}', space=vmem, size = 0x9000, scoped, tag = 'internal scratch']
  %s0 = inlined_call_operand.vmem [shape: bf16[128,128], index: 0, kind: input, shape index: {}]
  %s1 = inlined_call_operand.vmem [shape: bf16[128,128], index: 1, kind: input, shape index: {}]
  %s2 = inlined_call_operand.vmem [shape: f32[1,128], index: 2, kind: input, shape index: {}]
  %s3 = inlined_call_operand.vmem [shape: f32[128,128], index: 3, kind: output, shape index: {}]
  %s4 = sld [smem:[#allocation0]]
  $region30: #{gcnvae_forward.7} parent=0
    _
  %s6 = ssub.s32 1, %s4
  %s7 = scalar_select 0, %s6, %s4
  // Predicated region
  $region2: #{gcnvae_forward.7} parent=0 // pred_check
    _
  $region3: #{gcnvae_forward.7} parent=0 // pred_check_branch
    %9 = sbr.rel (0) target = $region5
  $region4: #{gcnvae_forward.7} parent=0 // pred_region
    _
  $region5: #{gcnvae_forward.7} parent=0 // pred_fallthru
    _
  // Predicated region
  $region6: #{gcnvae_forward.7} parent=0 // pred_check
    _
  $region7: #{gcnvae_forward.7} parent=0 // pred_check_branch
    %11 = sbr.rel (0) target = $region9
  $region8: #{gcnvae_forward.7} parent=0 // pred_region
    _
  $region9: #{gcnvae_forward.7} parent=0 // pred_fallthru
    _
  // Predicated region
  $region10: #{gcnvae_forward.7} parent=0 // pred_check
    _
  $region11: #{gcnvae_forward.7} parent=0 // pred_check_branch
    %13 = sbr.rel (0) target = $region13
  $region12: #{gcnvae_forward.7} parent=0 // pred_region
    _
  $region13: #{gcnvae_forward.7} parent=0 // pred_fallthru
    _
  %s14 = smul.u32 0, 128
  %s15 = sshra.s32 %s14, 3
  %s16 = sand.u32 %s14, 7
  %s17 = smul.addr %s15, 4
  %s18 = scalar_lea.vmem %s1, %s17
  %v19 = vld [vmem:[%s18] sm:$0xf]
  %v20 = vld [vmem:[%s18 + $0x4] sm:$0xf]
  %v21 = vld [vmem:[%s18 + $0x8] sm:$0xf]
  %v22 = vld [vmem:[%s18 + $0xc] sm:$0xf]
  %v23 = vld [vmem:[%s18 + $0x10] sm:$0xf]
  %v24 = vld [vmem:[%s18 + $0x14] sm:$0xf]
  %v25 = vld [vmem:[%s18 + $0x18] sm:$0xf]
  %v26 = vld [vmem:[%s18 + $0x1c] sm:$0xf]
  %v27 = vld [vmem:[%s18 + $0x20] sm:$0xf]
  %v28 = vld [vmem:[%s18 + $0x24] sm:$0xf]
  %v29 = vld [vmem:[%s18 + $0x28] sm:$0xf]
  %v30 = vld [vmem:[%s18 + $0x2c] sm:$0xf]
  %v31 = vld [vmem:[%s18 + $0x30] sm:$0xf]
  %v32 = vld [vmem:[%s18 + $0x34] sm:$0xf]
  %v33 = vld [vmem:[%s18 + $0x38] sm:$0xf]
  %v34 = vld [vmem:[%s18 + $0x3c] sm:$0xf]
  %v35 = vld [vmem:[%s0] sm:$0xf]
  %v36 = vld [vmem:[%s0 + $0x4] sm:$0xf]
  %v37 = vld [vmem:[%s0 + $0x8] sm:$0xf]
  %v38 = vld [vmem:[%s0 + $0xc] sm:$0xf]
  %v39 = vld [vmem:[%s0 + $0x10] sm:$0xf]
  %v40 = vld [vmem:[%s0 + $0x14] sm:$0xf]
  %v41 = vld [vmem:[%s0 + $0x18] sm:$0xf]
  %v42 = vld [vmem:[%s0 + $0x1c] sm:$0xf]
  %v43 = vld [vmem:[%s0 + $0x20] sm:$0xf]
  %v44 = vld [vmem:[%s0 + $0x24] sm:$0xf]
  %v45 = vld [vmem:[%s0 + $0x28] sm:$0xf]
  %v46 = vld [vmem:[%s0 + $0x2c] sm:$0xf]
  %v47 = vld [vmem:[%s0 + $0x30] sm:$0xf]
  %v48 = vld [vmem:[%s0 + $0x34] sm:$0xf]
  %v49 = vld [vmem:[%s0 + $0x38] sm:$0xf]
  %v50 = vld [vmem:[%s0 + $0x3c] sm:$0xf]
  %v67 = vunpack.c.l.b16 %v35
  %v68 = vunpack.c.l.b16 %v36
  %v69 = vunpack.c.l.b16 %v37
  %v70 = vunpack.c.l.b16 %v38
  %v71 = vunpack.c.l.b16 %v39
  %v72 = vunpack.c.l.b16 %v40
  %v73 = vunpack.c.l.b16 %v41
  %v74 = vunpack.c.l.b16 %v42
  %v75 = vunpack.c.l.b16 %v43
  %v76 = vunpack.c.l.b16 %v44
  %v77 = vunpack.c.l.b16 %v45
  %v78 = vunpack.c.l.b16 %v46
  %v79 = vunpack.c.l.b16 %v47
  %v80 = vunpack.c.l.b16 %v48
  %v81 = vunpack.c.l.b16 %v49
  %v82 = vunpack.c.l.b16 %v50
  %v83 = vpack.c.b16 %v68, %v67
  %v84 = vpack.c.b16 %v70, %v69
  %v85 = vpack.c.b16 %v72, %v71
  %v86 = vpack.c.b16 %v74, %v73
  %v87 = vpack.c.b16 %v76, %v75
  %v88 = vpack.c.b16 %v78, %v77
  %v89 = vpack.c.b16 %v80, %v79
  %v90 = vpack.c.b16 %v82, %v81
  %v115 = vunpack.c.l.b16 %v19
  %v116 = vunpack.c.l.b16 %v20
  %v117 = vunpack.c.l.b16 %v21
  %v118 = vunpack.c.l.b16 %v22
  %v119 = vunpack.c.l.b16 %v23
  %v120 = vunpack.c.l.b16 %v24
  %v121 = vunpack.c.l.b16 %v25
  %v122 = vunpack.c.l.b16 %v26
  %v123 = vunpack.c.l.b16 %v27
  %v124 = vunpack.c.l.b16 %v28
  %v125 = vunpack.c.l.b16 %v29
  %v126 = vunpack.c.l.b16 %v30
  %v127 = vunpack.c.l.b16 %v31
  %v128 = vunpack.c.l.b16 %v32
  %v129 = vunpack.c.l.b16 %v33
  %v130 = vunpack.c.l.b16 %v34
  %v131 = vpack.c.b16 %v116, %v115
  %v132 = vpack.c.b16 %v118, %v117
  %v133 = vpack.c.b16 %v120, %v119
  %v134 = vpack.c.b16 %v122, %v121
  %v135 = vpack.c.b16 %v124, %v123
  %v136 = vpack.c.b16 %v126, %v125
  %v137 = vpack.c.b16 %v128, %v127
  %v138 = vpack.c.b16 %v130, %v129
  %147 = vmatpush.bf16.msra.mxu0 %v138
  %148 = vmatpush.bf16.msra.mxu0 %v137
  %149 = vmatpush.bf16.msra.mxu0 %v136
  %150 = vmatpush.bf16.msra.mxu0 %v135
  %151 = vmatpush.bf16.msra.mxu0 %v134
  %152 = vmatpush.bf16.msra.mxu0 %v133
  %153 = vmatpush.bf16.msra.mxu0 %v132
  %154 = vmatpush.bf16.msra.mxu0 %v131
  %155 = vmatmul.bf16.gmra.mxu0 %v83
  %v156 = vpop.f32.mrf.mxu0
  %v157 = vadd.f32 0.0, %v156
  %v158 = vpop.f32.mrf.mxu0
  %v159 = vadd.f32 0.0, %v158
  %160 = vmatmul.bf16.gmra.mxu0 %v84
  %v161 = vpop.f32.mrf.mxu0
  %v162 = vadd.f32 0.0, %v161
  %v163 = vpop.f32.mrf.mxu0
  %v164 = vadd.f32 0.0, %v163
  %165 = vmatmul.bf16.gmra.mxu0 %v85
  %v166 = vpop.f32.mrf.mxu0
  %v167 = vadd.f32 0.0, %v166
  %v168 = vpop.f32.mrf.mxu0
  %v169 = vadd.f32 0.0, %v168
  %170 = vmatmul.bf16.gmra.mxu0 %v86
  %v171 = vpop.f32.mrf.mxu0
  %v172 = vadd.f32 0.0, %v171
  %v173 = vpop.f32.mrf.mxu0
  %v174 = vadd.f32 0.0, %v173
  %175 = vmatmul.bf16.gmra.mxu0 %v87
  %v176 = vpop.f32.mrf.mxu0
  %v177 = vadd.f32 0.0, %v176
  %v178 = vpop.f32.mrf.mxu0
  %v179 = vadd.f32 0.0, %v178
  %180 = vmatmul.bf16.gmra.mxu0 %v88
  %v181 = vpop.f32.mrf.mxu0
  %v182 = vadd.f32 0.0, %v181
  %v183 = vpop.f32.mrf.mxu0
  %v184 = vadd.f32 0.0, %v183
  %185 = vmatmul.bf16.gmra.mxu0 %v89
  %v186 = vpop.f32.mrf.mxu0
  %v187 = vadd.f32 0.0, %v186
  %v188 = vpop.f32.mrf.mxu0
  %v189 = vadd.f32 0.0, %v188
  %190 = vmatmul.bf16.gmra.mxu0 %v90
  %v191 = vpop.f32.mrf.mxu0
  %v192 = vadd.f32 0.0, %v191
  %v193 = vpop.f32.mrf.mxu0
  %v194 = vadd.f32 0.0, %v193
  %195 = vdwg.mxu0
  %p196 = scmp.eq.s32.totalorder 0, 0
  // Predicated region
  $region14: #{gcnvae_forward.7} parent=0 // pred_check
    %p197 = pneg %p196
  $region15: #{gcnvae_forward.7} parent=0 // pred_check_branch
    %199 = sbr.rel (%p197) target = $region17
  $region16: #{gcnvae_forward.7} parent=0 // pred_region
    %200 = vst [vmem:[%s3] sm:$0xff] 0.0
    %201 = vst [vmem:[%s3 + $0x8] sm:$0xff] 0.0
    %202 = vst [vmem:[%s3 + $0x10] sm:$0xff] 0.0
    %203 = vst [vmem:[%s3 + $0x18] sm:$0xff] 0.0
    %204 = vst [vmem:[%s3 + $0x20] sm:$0xff] 0.0
    %205 = vst [vmem:[%s3 + $0x28] sm:$0xff] 0.0
    %206 = vst [vmem:[%s3 + $0x30] sm:$0xff] 0.0
    %207 = vst [vmem:[%s3 + $0x38] sm:$0xff] 0.0
    %208 = vst [vmem:[%s3 + $0x40] sm:$0xff] 0.0
    %209 = vst [vmem:[%s3 + $0x48] sm:$0xff] 0.0
    %210 = vst [vmem:[%s3 + $0x50] sm:$0xff] 0.0
    %211 = vst [vmem:[%s3 + $0x58] sm:$0xff] 0.0
    %212 = vst [vmem:[%s3 + $0x60] sm:$0xff] 0.0
    %213 = vst [vmem:[%s3 + $0x68] sm:$0xff] 0.0
    %214 = vst [vmem:[%s3 + $0x70] sm:$0xff] 0.0
    %215 = vst [vmem:[%s3 + $0x78] sm:$0xff] 0.0
  $region17: #{gcnvae_forward.7} parent=0 // pred_fallthru
    _
  %v216 = vld [vmem:[%s3] sm:$0xff]
  %v217 = vld [vmem:[%s3 + $0x8] sm:$0xff]
  %v218 = vld [vmem:[%s3 + $0x10] sm:$0xff]
  %v219 = vld [vmem:[%s3 + $0x18] sm:$0xff]
  %v220 = vld [vmem:[%s3 + $0x20] sm:$0xff]
  %v221 = vld [vmem:[%s3 + $0x28] sm:$0xff]
  %v222 = vld [vmem:[%s3 + $0x30] sm:$0xff]
  %v223 = vld [vmem:[%s3 + $0x38] sm:$0xff]
  %v224 = vld [vmem:[%s3 + $0x40] sm:$0xff]
  %v225 = vld [vmem:[%s3 + $0x48] sm:$0xff]
  %v226 = vld [vmem:[%s3 + $0x50] sm:$0xff]
  %v227 = vld [vmem:[%s3 + $0x58] sm:$0xff]
  %v228 = vld [vmem:[%s3 + $0x60] sm:$0xff]
  %v229 = vld [vmem:[%s3 + $0x68] sm:$0xff]
  %v230 = vld [vmem:[%s3 + $0x70] sm:$0xff]
  %v231 = vld [vmem:[%s3 + $0x78] sm:$0xff]
  %v232 = vadd.f32 %v216, %v157
  %v233 = vadd.f32 %v217, %v159
  %v234 = vadd.f32 %v218, %v162
  %v235 = vadd.f32 %v219, %v164
  %v236 = vadd.f32 %v220, %v167
  %v237 = vadd.f32 %v221, %v169
  %v238 = vadd.f32 %v222, %v172
  %v239 = vadd.f32 %v223, %v174
  %v240 = vadd.f32 %v224, %v177
  %v241 = vadd.f32 %v225, %v179
  %v242 = vadd.f32 %v226, %v182
  %v243 = vadd.f32 %v227, %v184
  %v244 = vadd.f32 %v228, %v187
  %v245 = vadd.f32 %v229, %v189
  %v246 = vadd.f32 %v230, %v192
  %v247 = vadd.f32 %v231, %v194
  %248 = vst [vmem:[%s3] sm:$0xff] %v232
  %249 = vst [vmem:[%s3 + $0x8] sm:$0xff] %v233
  %250 = vst [vmem:[%s3 + $0x10] sm:$0xff] %v234
  %251 = vst [vmem:[%s3 + $0x18] sm:$0xff] %v235
  %252 = vst [vmem:[%s3 + $0x20] sm:$0xff] %v236
  %253 = vst [vmem:[%s3 + $0x28] sm:$0xff] %v237
  %254 = vst [vmem:[%s3 + $0x30] sm:$0xff] %v238
  %255 = vst [vmem:[%s3 + $0x38] sm:$0xff] %v239
  %256 = vst [vmem:[%s3 + $0x40] sm:$0xff] %v240
  %257 = vst [vmem:[%s3 + $0x48] sm:$0xff] %v241
  %258 = vst [vmem:[%s3 + $0x50] sm:$0xff] %v242
  %259 = vst [vmem:[%s3 + $0x58] sm:$0xff] %v243
  %260 = vst [vmem:[%s3 + $0x60] sm:$0xff] %v244
  %261 = vst [vmem:[%s3 + $0x68] sm:$0xff] %v245
  %262 = vst [vmem:[%s3 + $0x70] sm:$0xff] %v246
  %263 = vst [vmem:[%s3 + $0x78] sm:$0xff] %v247
  // Predicated region
  $region18: #{gcnvae_forward.7} parent=0 // pred_check
    %p264 = pneg %p196
  $region19: #{gcnvae_forward.7} parent=0 // pred_check_branch
    %266 = sbr.rel (%p264) target = $region21
  $region20: #{gcnvae_forward.7} parent=0 // pred_region
    %v267 = vld [vmem:[%s3] sm:$0xff]
    %v268 = vld [vmem:[%s3 + $0x8] sm:$0xff]
    %v269 = vld [vmem:[%s3 + $0x10] sm:$0xff]
    %v270 = vld [vmem:[%s3 + $0x18] sm:$0xff]
    %v271 = vld [vmem:[%s3 + $0x20] sm:$0xff]
    %v272 = vld [vmem:[%s3 + $0x28] sm:$0xff]
    %v273 = vld [vmem:[%s3 + $0x30] sm:$0xff]
    %v274 = vld [vmem:[%s3 + $0x38] sm:$0xff]
    %v275 = vld [vmem:[%s3 + $0x40] sm:$0xff]
    %v276 = vld [vmem:[%s3 + $0x48] sm:$0xff]
    %v277 = vld [vmem:[%s3 + $0x50] sm:$0xff]
    %v278 = vld [vmem:[%s3 + $0x58] sm:$0xff]
    %v279 = vld [vmem:[%s3 + $0x60] sm:$0xff]
    %v280 = vld [vmem:[%s3 + $0x68] sm:$0xff]
    %v281 = vld [vmem:[%s3 + $0x70] sm:$0xff]
    %v282 = vld [vmem:[%s3 + $0x78] sm:$0xff]
    %v283 = vld [vmem:[%s2] sm:$0x1]
    %v285 = vperm.slane %v283, 0
    %v287 = vadd.f32 %v267, %v285
    %v288 = vadd.f32 %v268, %v285
    %v289 = vadd.f32 %v269, %v285
    %v290 = vadd.f32 %v270, %v285
    %v291 = vadd.f32 %v271, %v285
    %v292 = vadd.f32 %v272, %v285
    %v293 = vadd.f32 %v273, %v285
    %v294 = vadd.f32 %v274, %v285
    %v295 = vadd.f32 %v275, %v285
    %v296 = vadd.f32 %v276, %v285
    %v297 = vadd.f32 %v277, %v285
    %v298 = vadd.f32 %v278, %v285
    %v299 = vadd.f32 %v279, %v285
    %v300 = vadd.f32 %v280, %v285
    %v301 = vadd.f32 %v281, %v285
    %v302 = vadd.f32 %v282, %v285
    %303 = vst [vmem:[%s3] sm:$0xff] %v287
    %304 = vst [vmem:[%s3 + $0x8] sm:$0xff] %v288
    %305 = vst [vmem:[%s3 + $0x10] sm:$0xff] %v289
    %306 = vst [vmem:[%s3 + $0x18] sm:$0xff] %v290
    %307 = vst [vmem:[%s3 + $0x20] sm:$0xff] %v291
    %308 = vst [vmem:[%s3 + $0x28] sm:$0xff] %v292
    %309 = vst [vmem:[%s3 + $0x30] sm:$0xff] %v293
    %310 = vst [vmem:[%s3 + $0x38] sm:$0xff] %v294
    %311 = vst [vmem:[%s3 + $0x40] sm:$0xff] %v295
    %312 = vst [vmem:[%s3 + $0x48] sm:$0xff] %v296
    %313 = vst [vmem:[%s3 + $0x50] sm:$0xff] %v297
    %314 = vst [vmem:[%s3 + $0x58] sm:$0xff] %v298
    %315 = vst [vmem:[%s3 + $0x60] sm:$0xff] %v299
    %316 = vst [vmem:[%s3 + $0x68] sm:$0xff] %v300
    %317 = vst [vmem:[%s3 + $0x70] sm:$0xff] %v301
    %318 = vst [vmem:[%s3 + $0x78] sm:$0xff] %v302
  $region21: #{gcnvae_forward.7} parent=0 // pred_fallthru
    _
  // Predicated region
  $region22: #{gcnvae_forward.7} parent=0 // pred_check
    _
  $region23: #{gcnvae_forward.7} parent=0 // pred_check_branch
    %320 = sbr.rel (0) target = $region25
  $region24: #{gcnvae_forward.7} parent=0 // pred_region
    _
  $region25: #{gcnvae_forward.7} parent=0 // pred_fallthru
    _
  // Predicated region
  $region26: #{gcnvae_forward.7} parent=0 // pred_check
    _
  $region27: #{gcnvae_forward.7} parent=0 // pred_check_branch
    %322 = sbr.rel (0) target = $region29
  $region28: #{gcnvae_forward.7} parent=0 // pred_region
    _
  $region29: #{gcnvae_forward.7} parent=0 // pred_fallthru
    _

// kernel: gcnvae_forward.4
$region0: #{gcnvae_forward.4}
  #allocation0 [shape = 'u32[]', space=smem, size = 0x4, offset = 0x4, fixed_abs, tag = 'smem constant byte address 0x4 - core index']
  #allocation1 [shape = 'u32[72,128]{1,0:T(1,128)}', space=vmem, size = 0x9000, scoped, tag = 'internal scratch']
  #allocation2 [shape = 'f32[128,128]{1,0:T(8,128)}', space=vmem, size = 0x10000, scoped, tag = 'scratch operand']
  %s0 = inlined_call_operand.vmem [shape: bf16[128,128], index: 0, kind: input, shape index: {}]
  %s1 = inlined_call_operand.vmem [shape: bf16[128,128], index: 1, kind: input, shape index: {}]
  %s2 = inlined_call_operand.vmem [shape: f32[1,128], index: 2, kind: input, shape index: {}]
  %s3 = inlined_call_operand.vmem [shape: bf16[128,128], index: 3, kind: output, shape index: {}]
  %s4 = sld [smem:[#allocation0]]
  $region30: #{gcnvae_forward.4} parent=0
    _
  %s6 = ssub.s32 1, %s4
  %s7 = scalar_select 0, %s6, %s4
  // Predicated region
  $region2: #{gcnvae_forward.4} parent=0 // pred_check
    _
  $region3: #{gcnvae_forward.4} parent=0 // pred_check_branch
    %9 = sbr.rel (0) target = $region5
  $region4: #{gcnvae_forward.4} parent=0 // pred_region
    _
  $region5: #{gcnvae_forward.4} parent=0 // pred_fallthru
    _
  // Predicated region
  $region6: #{gcnvae_forward.4} parent=0 // pred_check
    _
  $region7: #{gcnvae_forward.4} parent=0 // pred_check_branch
    %11 = sbr.rel (0) target = $region9
  $region8: #{gcnvae_forward.4} parent=0 // pred_region
    _
  $region9: #{gcnvae_forward.4} parent=0 // pred_fallthru
    _
  // Predicated region
  $region10: #{gcnvae_forward.4} parent=0 // pred_check
    _
  $region11: #{gcnvae_forward.4} parent=0 // pred_check_branch
    %13 = sbr.rel (0) target = $region13
  $region12: #{gcnvae_forward.4} parent=0 // pred_region
    _
  $region13: #{gcnvae_forward.4} parent=0 // pred_fallthru
    _
  %s14 = smul.u32 0, 128
  %s15 = sshra.s32 %s14, 3
  %s16 = sand.u32 %s14, 7
  %s17 = smul.addr %s15, 4
  %s18 = scalar_lea.vmem %s1, %s17
  %v19 = vld [vmem:[%s18] sm:$0xf]
  %v20 = vld [vmem:[%s18 + $0x4] sm:$0xf]
  %v21 = vld [vmem:[%s18 + $0x8] sm:$0xf]
  %v22 = vld [vmem:[%s18 + $0xc] sm:$0xf]
  %v23 = vld [vmem:[%s18 + $0x10] sm:$0xf]
  %v24 = vld [vmem:[%s18 + $0x14] sm:$0xf]
  %v25 = vld [vmem:[%s18 + $0x18] sm:$0xf]
  %v26 = vld [vmem:[%s18 + $0x1c] sm:$0xf]
  %v27 = vld [vmem:[%s18 + $0x20] sm:$0xf]
  %v28 = vld [vmem:[%s18 + $0x24] sm:$0xf]
  %v29 = vld [vmem:[%s18 + $0x28] sm:$0xf]
  %v30 = vld [vmem:[%s18 + $0x2c] sm:$0xf]
  %v31 = vld [vmem:[%s18 + $0x30] sm:$0xf]
  %v32 = vld [vmem:[%s18 + $0x34] sm:$0xf]
  %v33 = vld [vmem:[%s18 + $0x38] sm:$0xf]
  %v34 = vld [vmem:[%s18 + $0x3c] sm:$0xf]
  %v35 = vld [vmem:[%s0] sm:$0xf]
  %v36 = vld [vmem:[%s0 + $0x4] sm:$0xf]
  %v37 = vld [vmem:[%s0 + $0x8] sm:$0xf]
  %v38 = vld [vmem:[%s0 + $0xc] sm:$0xf]
  %v39 = vld [vmem:[%s0 + $0x10] sm:$0xf]
  %v40 = vld [vmem:[%s0 + $0x14] sm:$0xf]
  %v41 = vld [vmem:[%s0 + $0x18] sm:$0xf]
  %v42 = vld [vmem:[%s0 + $0x1c] sm:$0xf]
  %v43 = vld [vmem:[%s0 + $0x20] sm:$0xf]
  %v44 = vld [vmem:[%s0 + $0x24] sm:$0xf]
  %v45 = vld [vmem:[%s0 + $0x28] sm:$0xf]
  %v46 = vld [vmem:[%s0 + $0x2c] sm:$0xf]
  %v47 = vld [vmem:[%s0 + $0x30] sm:$0xf]
  %v48 = vld [vmem:[%s0 + $0x34] sm:$0xf]
  %v49 = vld [vmem:[%s0 + $0x38] sm:$0xf]
  %v50 = vld [vmem:[%s0 + $0x3c] sm:$0xf]
  %v67 = vunpack.c.l.b16 %v35
  %v68 = vunpack.c.l.b16 %v36
  %v69 = vunpack.c.l.b16 %v37
  %v70 = vunpack.c.l.b16 %v38
  %v71 = vunpack.c.l.b16 %v39
  %v72 = vunpack.c.l.b16 %v40
  %v73 = vunpack.c.l.b16 %v41
  %v74 = vunpack.c.l.b16 %v42
  %v75 = vunpack.c.l.b16 %v43
  %v76 = vunpack.c.l.b16 %v44
  %v77 = vunpack.c.l.b16 %v45
  %v78 = vunpack.c.l.b16 %v46
  %v79 = vunpack.c.l.b16 %v47
  %v80 = vunpack.c.l.b16 %v48
  %v81 = vunpack.c.l.b16 %v49
  %v82 = vunpack.c.l.b16 %v50
  %v83 = vpack.c.b16 %v68, %v67
  %v84 = vpack.c.b16 %v70, %v69
  %v85 = vpack.c.b16 %v72, %v71
  %v86 = vpack.c.b16 %v74, %v73
  %v87 = vpack.c.b16 %v76, %v75
  %v88 = vpack.c.b16 %v78, %v77
  %v89 = vpack.c.b16 %v80, %v79
  %v90 = vpack.c.b16 %v82, %v81
  %v115 = vunpack.c.l.b16 %v19
  %v116 = vunpack.c.l.b16 %v20
  %v117 = vunpack.c.l.b16 %v21
  %v118 = vunpack.c.l.b16 %v22
  %v119 = vunpack.c.l.b16 %v23
  %v120 = vunpack.c.l.b16 %v24
  %v121 = vunpack.c.l.b16 %v25
  %v122 = vunpack.c.l.b16 %v26
  %v123 = vunpack.c.l.b16 %v27
  %v124 = vunpack.c.l.b16 %v28
  %v125 = vunpack.c.l.b16 %v29
  %v126 = vunpack.c.l.b16 %v30
  %v127 = vunpack.c.l.b16 %v31
  %v128 = vunpack.c.l.b16 %v32
  %v129 = vunpack.c.l.b16 %v33
  %v130 = vunpack.c.l.b16 %v34
  %v131 = vpack.c.b16 %v116, %v115
  %v132 = vpack.c.b16 %v118, %v117
  %v133 = vpack.c.b16 %v120, %v119
  %v134 = vpack.c.b16 %v122, %v121
  %v135 = vpack.c.b16 %v124, %v123
  %v136 = vpack.c.b16 %v126, %v125
  %v137 = vpack.c.b16 %v128, %v127
  %v138 = vpack.c.b16 %v130, %v129
  %147 = vmatpush.bf16.msra.mxu0 %v138
  %148 = vmatpush.bf16.msra.mxu0 %v137
  %149 = vmatpush.bf16.msra.mxu0 %v136
  %150 = vmatpush.bf16.msra.mxu0 %v135
  %151 = vmatpush.bf16.msra.mxu0 %v134
  %152 = vmatpush.bf16.msra.mxu0 %v133
  %153 = vmatpush.bf16.msra.mxu0 %v132
  %154 = vmatpush.bf16.msra.mxu0 %v131
  %155 = vmatmul.bf16.gmra.mxu0 %v83
  %v156 = vpop.f32.mrf.mxu0
  %v157 = vadd.f32 0.0, %v156
  %v158 = vpop.f32.mrf.mxu0
  %v159 = vadd.f32 0.0, %v158
  %160 = vmatmul.bf16.gmra.mxu0 %v84
  %v161 = vpop.f32.mrf.mxu0
  %v162 = vadd.f32 0.0, %v161
  %v163 = vpop.f32.mrf.mxu0
  %v164 = vadd.f32 0.0, %v163
  %165 = vmatmul.bf16.gmra.mxu0 %v85
  %v166 = vpop.f32.mrf.mxu0
  %v167 = vadd.f32 0.0, %v166
  %v168 = vpop.f32.mrf.mxu0
  %v169 = vadd.f32 0.0, %v168
  %170 = vmatmul.bf16.gmra.mxu0 %v86
  %v171 = vpop.f32.mrf.mxu0
  %v172 = vadd.f32 0.0, %v171
  %v173 = vpop.f32.mrf.mxu0
  %v174 = vadd.f32 0.0, %v173
  %175 = vmatmul.bf16.gmra.mxu0 %v87
  %v176 = vpop.f32.mrf.mxu0
  %v177 = vadd.f32 0.0, %v176
  %v178 = vpop.f32.mrf.mxu0
  %v179 = vadd.f32 0.0, %v178
  %180 = vmatmul.bf16.gmra.mxu0 %v88
  %v181 = vpop.f32.mrf.mxu0
  %v182 = vadd.f32 0.0, %v181
  %v183 = vpop.f32.mrf.mxu0
  %v184 = vadd.f32 0.0, %v183
  %185 = vmatmul.bf16.gmra.mxu0 %v89
  %v186 = vpop.f32.mrf.mxu0
  %v187 = vadd.f32 0.0, %v186
  %v188 = vpop.f32.mrf.mxu0
  %v189 = vadd.f32 0.0, %v188
  %190 = vmatmul.bf16.gmra.mxu0 %v90
  %v191 = vpop.f32.mrf.mxu0
  %v192 = vadd.f32 0.0, %v191
  %v193 = vpop.f32.mrf.mxu0
  %v194 = vadd.f32 0.0, %v193
  %195 = vdwg.mxu0
  %p196 = scmp.eq.s32.totalorder 0, 0
  // Predicated region
  $region14: #{gcnvae_forward.4} parent=0 // pred_check
    %p197 = pneg %p196
  $region15: #{gcnvae_forward.4} parent=0 // pred_check_branch
    %199 = sbr.rel (%p197) target = $region17
  $region16: #{gcnvae_forward.4} parent=0 // pred_region
    %200 = vst [vmem:[#allocation2] sm:$0xff] 0.0
    %201 = vst [vmem:[#allocation2 + $0x8] sm:$0xff] 0.0
    %202 = vst [vmem:[#allocation2 + $0x10] sm:$0xff] 0.0
    %203 = vst [vmem:[#allocation2 + $0x18] sm:$0xff] 0.0
    %204 = vst [vmem:[#allocation2 + $0x20] sm:$0xff] 0.0
    %205 = vst [vmem:[#allocation2 + $0x28] sm:$0xff] 0.0
    %206 = vst [vmem:[#allocation2 + $0x30] sm:$0xff] 0.0
    %207 = vst [vmem:[#allocation2 + $0x38] sm:$0xff] 0.0
    %208 = vst [vmem:[#allocation2 + $0x40] sm:$0xff] 0.0
    %209 = vst [vmem:[#allocation2 + $0x48] sm:$0xff] 0.0
    %210 = vst [vmem:[#allocation2 + $0x50] sm:$0xff] 0.0
    %211 = vst [vmem:[#allocation2 + $0x58] sm:$0xff] 0.0
    %212 = vst [vmem:[#allocation2 + $0x60] sm:$0xff] 0.0
    %213 = vst [vmem:[#allocation2 + $0x68] sm:$0xff] 0.0
    %214 = vst [vmem:[#allocation2 + $0x70] sm:$0xff] 0.0
    %215 = vst [vmem:[#allocation2 + $0x78] sm:$0xff] 0.0
  $region17: #{gcnvae_forward.4} parent=0 // pred_fallthru
    _
  %v216 = vld [vmem:[#allocation2] sm:$0xff]
  %v217 = vld [vmem:[#allocation2 + $0x8] sm:$0xff]
  %v218 = vld [vmem:[#allocation2 + $0x10] sm:$0xff]
  %v219 = vld [vmem:[#allocation2 + $0x18] sm:$0xff]
  %v220 = vld [vmem:[#allocation2 + $0x20] sm:$0xff]
  %v221 = vld [vmem:[#allocation2 + $0x28] sm:$0xff]
  %v222 = vld [vmem:[#allocation2 + $0x30] sm:$0xff]
  %v223 = vld [vmem:[#allocation2 + $0x38] sm:$0xff]
  %v224 = vld [vmem:[#allocation2 + $0x40] sm:$0xff]
  %v225 = vld [vmem:[#allocation2 + $0x48] sm:$0xff]
  %v226 = vld [vmem:[#allocation2 + $0x50] sm:$0xff]
  %v227 = vld [vmem:[#allocation2 + $0x58] sm:$0xff]
  %v228 = vld [vmem:[#allocation2 + $0x60] sm:$0xff]
  %v229 = vld [vmem:[#allocation2 + $0x68] sm:$0xff]
  %v230 = vld [vmem:[#allocation2 + $0x70] sm:$0xff]
  %v231 = vld [vmem:[#allocation2 + $0x78] sm:$0xff]
  %v232 = vadd.f32 %v216, %v157
  %v233 = vadd.f32 %v217, %v159
  %v234 = vadd.f32 %v218, %v162
  %v235 = vadd.f32 %v219, %v164
  %v236 = vadd.f32 %v220, %v167
  %v237 = vadd.f32 %v221, %v169
  %v238 = vadd.f32 %v222, %v172
  %v239 = vadd.f32 %v223, %v174
  %v240 = vadd.f32 %v224, %v177
  %v241 = vadd.f32 %v225, %v179
  %v242 = vadd.f32 %v226, %v182
  %v243 = vadd.f32 %v227, %v184
  %v244 = vadd.f32 %v228, %v187
  %v245 = vadd.f32 %v229, %v189
  %v246 = vadd.f32 %v230, %v192
  %v247 = vadd.f32 %v231, %v194
  %248 = vst [vmem:[#allocation2] sm:$0xff] %v232
  %249 = vst [vmem:[#allocation2 + $0x8] sm:$0xff] %v233
  %250 = vst [vmem:[#allocation2 + $0x10] sm:$0xff] %v234
  %251 = vst [vmem:[#allocation2 + $0x18] sm:$0xff] %v235
  %252 = vst [vmem:[#allocation2 + $0x20] sm:$0xff] %v236
  %253 = vst [vmem:[#allocation2 + $0x28] sm:$0xff] %v237
  %254 = vst [vmem:[#allocation2 + $0x30] sm:$0xff] %v238
  %255 = vst [vmem:[#allocation2 + $0x38] sm:$0xff] %v239
  %256 = vst [vmem:[#allocation2 + $0x40] sm:$0xff] %v240
  %257 = vst [vmem:[#allocation2 + $0x48] sm:$0xff] %v241
  %258 = vst [vmem:[#allocation2 + $0x50] sm:$0xff] %v242
  %259 = vst [vmem:[#allocation2 + $0x58] sm:$0xff] %v243
  %260 = vst [vmem:[#allocation2 + $0x60] sm:$0xff] %v244
  %261 = vst [vmem:[#allocation2 + $0x68] sm:$0xff] %v245
  %262 = vst [vmem:[#allocation2 + $0x70] sm:$0xff] %v246
  %263 = vst [vmem:[#allocation2 + $0x78] sm:$0xff] %v247
  // Predicated region
  $region18: #{gcnvae_forward.4} parent=0 // pred_check
    %p264 = pneg %p196
  $region19: #{gcnvae_forward.4} parent=0 // pred_check_branch
    %266 = sbr.rel (%p264) target = $region21
  $region20: #{gcnvae_forward.4} parent=0 // pred_region
    %v267 = vld [vmem:[#allocation2] sm:$0xff]
    %v268 = vld [vmem:[#allocation2 + $0x8] sm:$0xff]
    %v269 = vld [vmem:[#allocation2 + $0x10] sm:$0xff]
    %v270 = vld [vmem:[#allocation2 + $0x18] sm:$0xff]
    %v271 = vld [vmem:[#allocation2 + $0x20] sm:$0xff]
    %v272 = vld [vmem:[#allocation2 + $0x28] sm:$0xff]
    %v273 = vld [vmem:[#allocation2 + $0x30] sm:$0xff]
    %v274 = vld [vmem:[#allocation2 + $0x38] sm:$0xff]
    %v275 = vld [vmem:[#allocation2 + $0x40] sm:$0xff]
    %v276 = vld [vmem:[#allocation2 + $0x48] sm:$0xff]
    %v277 = vld [vmem:[#allocation2 + $0x50] sm:$0xff]
    %v278 = vld [vmem:[#allocation2 + $0x58] sm:$0xff]
    %v279 = vld [vmem:[#allocation2 + $0x60] sm:$0xff]
    %v280 = vld [vmem:[#allocation2 + $0x68] sm:$0xff]
    %v281 = vld [vmem:[#allocation2 + $0x70] sm:$0xff]
    %v282 = vld [vmem:[#allocation2 + $0x78] sm:$0xff]
    %v283 = vld [vmem:[%s2] sm:$0x1]
    %v285 = vperm.slane %v283, 0
    %v287 = vadd.f32 %v267, %v285
    %v288 = vadd.f32 %v268, %v285
    %v289 = vadd.f32 %v269, %v285
    %v290 = vadd.f32 %v270, %v285
    %v291 = vadd.f32 %v271, %v285
    %v292 = vadd.f32 %v272, %v285
    %v293 = vadd.f32 %v273, %v285
    %v294 = vadd.f32 %v274, %v285
    %v295 = vadd.f32 %v275, %v285
    %v296 = vadd.f32 %v276, %v285
    %v297 = vadd.f32 %v277, %v285
    %v298 = vadd.f32 %v278, %v285
    %v299 = vadd.f32 %v279, %v285
    %v300 = vadd.f32 %v280, %v285
    %v301 = vadd.f32 %v281, %v285
    %v302 = vadd.f32 %v282, %v285
    %v303 = vpack.c.bf16 %v287, %v287
    %v304 = vpack.c.bf16 %v288, %v288
    %v305 = vpack.c.bf16 %v289, %v289
    %v306 = vpack.c.bf16 %v290, %v290
    %v307 = vpack.c.bf16 %v291, %v291
    %v308 = vpack.c.bf16 %v292, %v292
    %v309 = vpack.c.bf16 %v293, %v293
    %v310 = vpack.c.bf16 %v294, %v294
    %v311 = vpack.c.bf16 %v295, %v295
    %v312 = vpack.c.bf16 %v296, %v296
    %v313 = vpack.c.bf16 %v297, %v297
    %v314 = vpack.c.bf16 %v298, %v298
    %v315 = vpack.c.bf16 %v299, %v299
    %v316 = vpack.c.bf16 %v300, %v300
    %v317 = vpack.c.bf16 %v301, %v301
    %v318 = vpack.c.bf16 %v302, %v302
    %319 = vst [vmem:[%s3] sm:$0xf] %v303
    %320 = vst [vmem:[%s3 + $0x4] sm:$0xf] %v304
    %321 = vst [vmem:[%s3 + $0x8] sm:$0xf] %v305
    %322 = vst [vmem:[%s3 + $0xc] sm:$0xf] %v306
    %323 = vst [vmem:[%s3 + $0x10] sm:$0xf] %v307
    %324 = vst [vmem:[%s3 + $0x14] sm:$0xf] %v308
    %325 = vst [vmem:[%s3 + $0x18] sm:$0xf] %v309
    %326 = vst [vmem:[%s3 + $0x1c] sm:$0xf] %v310
    %327 = vst [vmem:[%s3 + $0x20] sm:$0xf] %v311
    %328 = vst [vmem:[%s3 + $0x24] sm:$0xf] %v312
    %329 = vst [vmem:[%s3 + $0x28] sm:$0xf] %v313
    %330 = vst [vmem:[%s3 + $0x2c] sm:$0xf] %v314
    %331 = vst [vmem:[%s3 + $0x30] sm:$0xf] %v315
    %332 = vst [vmem:[%s3 + $0x34] sm:$0xf] %v316
    %333 = vst [vmem:[%s3 + $0x38] sm:$0xf] %v317
    %334 = vst [vmem:[%s3 + $0x3c] sm:$0xf] %v318
  $region21: #{gcnvae_forward.4} parent=0 // pred_fallthru
    _
  // Predicated region
  $region22: #{gcnvae_forward.4} parent=0 // pred_check
    _
  $region23: #{gcnvae_forward.4} parent=0 // pred_check_branch
    %336 = sbr.rel (0) target = $region25
  $region24: #{gcnvae_forward.4} parent=0 // pred_region
    _
  $region25: #{gcnvae_forward.4} parent=0 // pred_fallthru
    _
  // Predicated region
  $region26: #{gcnvae_forward.4} parent=0 // pred_check
    _
  $region27: #{gcnvae_forward.4} parent=0 // pred_check_branch
    %338 = sbr.rel (0) target = $region29
  $region28: #{gcnvae_forward.4} parent=0 // pred_region
    _
  $region29: #{gcnvae_forward.4} parent=0 // pred_fallthru
    _

</llo_original>
